<compile_context>
chip_gen: v5e
topology: v5e:2x2
jax: 0.10.0
libtpu: 0.0.40
codegen_flags: <defaults>
</compile_context>

<pallas_src>
import jax
import jax.numpy as jnp
from jax.experimental import pallas as pl
from jax.experimental.pallas import tpu as pltpu

LANES = 128
TILE_BYTES = 4 * 1024 * 1024     # per-stream, per-pipeline-buffer VMEM budget
CHUNK_ROWS = 512                 # rows per in-kernel reduction chunk
VMEM_LIMIT = 32 * 1024 * 1024    # >= need; raises v5e's 16 MiB scoped default
EPS = 1e-5


def _sublane(dtype) -> int:
    # Minimum second-to-last tile dim: 8 (f32), 16 (bf16), 32 (int8/fp8).
    return max(8, 32 // jnp.dtype(dtype).itemsize)


def _make_mcc_kernel(*, total, tile_m, chunk, steps, n_full_blocks, needs_mask):
    n_chunks = tile_m // chunk

    def kernel(x_ref, t_ref, acc_ref):
        c = pl.program_id(0)
        s = pl.program_id(1)
        blk = c * steps + s                # global row-block index

        @pl.when(s == 0)
        def _init():
            acc_ref[...] = jnp.zeros_like(acc_ref)

        def accumulate(masked):
            def body(i, carry):
                pt8, p8, t8 = carry
                r0 = pl.multiple_of(i * chunk, chunk)
                x = x_ref[pl.ds(r0, chunk), :].astype(jnp.float32)
                t = t_ref[pl.ds(r0, chunk), :].astype(jnp.float32)
                p = jax.nn.sigmoid(x)      # exact (matches reference bitwise)
                if masked:
                    # Element-index mask: covers the partial last row-block,
                    # the <128 lane remainder and any overhang block at once.
                    # Garbage / pad values are discarded by the select.
                    row0 = blk * tile_m + i * chunk
                    ridx = jax.lax.broadcasted_iota(jnp.int32, (chunk, LANES), 0) + row0
                    lidx = jax.lax.broadcasted_iota(jnp.int32, (chunk, LANES), 1)
                    valid = ridx * LANES + lidx < total
                    p = jnp.where(valid, p, 0.0)
                    t = jnp.where(valid, t, 0.0)
                # (chunk,128) -> (8,128): pure cross-vreg VPU adds (no XLU).
                pt8 = pt8 + (p * t).reshape(chunk // 8, 8, LANES).sum(axis=0)
                p8 = p8 + p.reshape(chunk // 8, 8, LANES).sum(axis=0)
                t8 = t8 + t.reshape(chunk // 8, 8, LANES).sum(axis=0)
                return pt8, p8, t8

            z = jnp.zeros((8, LANES), jnp.float32)
            pt8, p8, t8 = jax.lax.fori_loop(0, n_chunks, body, (z, z, z))
            acc_ref[0, 0, :, :] += pt8
            acc_ref[0, 1, :, :] += p8
            acc_ref[0, 2, :, :] += t8

        if needs_mask:
            @pl.when(blk < n_full_blocks)
            def _interior():
                accumulate(False)

            @pl.when(blk >= n_full_blocks)
            def _boundary():
                accumulate(True)
        else:
            accumulate(False)

    return kernel


def _mcc_from_sums(sum_pt, sum_p, sum_t, total, eps):
    n = jnp.float32(total)
    tp = sum_pt + eps
    fp = (sum_p - sum_pt) + eps
    fn = (sum_t - sum_pt) + eps
    tn = (n - sum_p - sum_t + sum_pt) + eps
    numerator = tp * tn - fp * fn
    denominator = jnp.sqrt((tp + fp) * (tp + fn) * (tn + fp) * (tn + fn))
    return 1.0 - numerator / denominator


def mcc_loss(logits, target, eps: float = EPS):
    """Pallas implementation of MCCLoss.forward (scalar loss, f32)."""
    total = int(logits.size)
    assert int(target.size) == total, "logits/target size mismatch"
    assert total < 2**31, "element-index mask uses int32"

    x_flat = logits.reshape(-1)            # free: contiguous row-major
    t_flat = target.reshape(-1)

    m_s = max(_sublane(x_flat.dtype), _sublane(t_flat.dtype))
    rows = -(-total // LANES)

    # Tiny inputs: (8,128) tiling machinery is pure overhead -> plain JAX.
    if rows < m_s:
        p = jax.nn.sigmoid(x_flat.astype(jnp.float32))
        t = t_flat.astype(jnp.float32)
        return _mcc_from_sums(jnp.sum(p * t), jnp.sum(p), jnp.sum(t), total, eps)

    # Only if total is not a multiple of 128 do we pad the flat view up to
    # whole 128-lane rows (<=127 pad elements; pad VALUE is irrelevant because
    # the kernel masks by the true element count).  Aligned case: zero-copy.
    # TODO(synk): a fully copy-free path for total % 128 != 0 would need a 1-D
    # block layout or a manual-DMA kernel; not worth the lowering risk here.
    if rows * LANES != total:
        pad = rows * LANES - total
        x_flat = jnp.pad(x_flat, (0, pad))
        t_flat = jnp.pad(t_flat, (0, pad))
    x2 = x_flat.reshape(rows, LANES)
    t2 = t_flat.reshape(rows, LANES)

    # Tile rows: as big as the VMEM budget allows, multiple of the sublane
    # packing, never larger than the array (so only the LAST block can be
    # partial), and a multiple of the in-kernel chunk when chunked.
    itemsize = max(jnp.dtype(x2.dtype).itemsize, jnp.dtype(t2.dtype).itemsize)
    budget_rows = max(m_s, TILE_BYTES // (LANES * itemsize))
    tile_m = min(budget_rows, (rows // m_s) * m_s)
    if tile_m >= CHUNK_ROWS:
        tile_m = (tile_m // CHUNK_ROWS) * CHUNK_ROWS   # CHUNK_ROWS | tile_m
        chunk = CHUNK_ROWS
    else:
        chunk = tile_m                                  # single chunk (mult of 8)

    n_blocks = -(-rows // tile_m)
    num_par = 2 if n_blocks >= 2 else 1       # contiguous half per TC on v7x
    steps = -(-n_blocks // num_par)
    n_full_blocks = total // (tile_m * LANES)           # blocks needing no mask
    needs_mask = num_par * steps * tile_m * LANES > total
    last_block = n_blocks - 1

    def in_index(c, s):
        # Clamp so a possible overhang step (odd n_blocks with num_par=2)
        # re-reads the last real block instead of DMA-ing out of bounds; the
        # kernel masks its contribution to exactly zero.
        return (jnp.minimum(c * steps + s, last_block), 0)

    kernel = _make_mcc_kernel(total=total, tile_m=tile_m, chunk=chunk,
                              steps=steps, n_full_blocks=n_full_blocks,
                              needs_mask=needs_mask)

    partials = pl.pallas_call(
        kernel,
        out_shape=jax.ShapeDtypeStruct((num_par, 3, 8, LANES), jnp.float32),
        grid_spec=pltpu.PrefetchScalarGridSpec(
            num_scalar_prefetch=0,
            grid=(num_par, steps),
            in_specs=[pl.BlockSpec((tile_m, LANES), in_index),
                      pl.BlockSpec((tile_m, LANES), in_index)],
            # Output block index depends only on the parallel axis -> stays
            # resident in VMEM across the reduction axis (it IS the accumulator).
            out_specs=pl.BlockSpec((1, 3, 8, LANES), lambda c, s: (c, 0, 0, 0)),
        ),
        compiler_params=pltpu.CompilerParams(
            dimension_semantics=("parallel", "arbitrary"),
            vmem_limit_bytes=VMEM_LIMIT,
        ),
    )(x2, t2)

    # Tiny epilogue in plain JAX (one 24 KiB reduce + ~20 flops).
    sums = jnp.sum(partials, axis=(0, 2, 3))   # [sum(p*t), sum(p), sum(t)]
    return _mcc_from_sums(sums[0], sums[1], sums[2], total, eps)


def mcc_loss_ref(logits, target, eps: float = EPS):
    """Pure-JAX reference matching the PyTorch forward."""
    p = jax.nn.sigmoid(logits.astype(jnp.float32)).reshape(-1)
    t = target.astype(jnp.float32).reshape(-1)
    tp = jnp.sum(p * t) + eps
    tn = jnp.sum((1 - p) * (1 - t)) + eps
    fp = jnp.sum(p * (1 - t)) + eps
    fn = jnp.sum((1 - p) * t) + eps
    num = tp * tn - fp * fn
    den = jnp.sqrt((tp + fp) * (tp + fn) * (tn + fp) * (tn + fn))
    return 1.0 - num / den


if __name__ == "__main__":
    key = jax.random.PRNGKey(0)
    k1, k2, k3, k4, k5 = jax.random.split(key, 5)

    # 1) Aligned case (total % 128 == 0): zero-copy path, no masking.
    B, C, H, W = 2, 1, 64, 64
    logits = jax.random.normal(k1, (B, C, H, W), dtype=jnp.float32)
    target = (jax.random.uniform(k2, (B, C, H, W)) > 0.5).astype(jnp.float32)
    out = jax.block_until_ready(mcc_loss(logits, target))
    ref = jax.block_until_ready(mcc_loss_ref(logits, target))
    assert jnp.allclose(out, ref, atol=1e-5, rtol=1e-5), (out, ref)

    # 2) Ragged case (total % 128 != 0): minimal pad + in-kernel element mask,
    #    two row-blocks -> exercises the parallel axis and the masked path.
    logits2 = jax.random.normal(k3, (2, 1, 67, 67), dtype=jnp.float32)
    target2 = (jax.random.uniform(k4, (2, 1, 67, 67)) > 0.5).astype(jnp.float32)
    out2 = jax.block_until_ready(mcc_loss(logits2, target2))
    ref2 = jax.block_until_ready(mcc_loss_ref(logits2, target2))
    assert jnp.allclose(out2, ref2, atol=1e-5, rtol=1e-5), (out2, ref2)

    # 3) bf16 logits + f32 target: multi-block, partial last block, chunked loop.
    logits3 = jax.random.normal(k5, (4, 1, 160, 160), dtype=jnp.bfloat16)
    target3 = (logits3.astype(jnp.float32) > 0.3).astype(jnp.float32)
    out3 = jax.block_until_ready(mcc_loss(logits3, target3))
    ref3 = jax.block_until_ready(mcc_loss_ref(logits3, target3))
    assert jnp.allclose(out3, ref3, atol=1e-4, rtol=1e-4), (out3, ref3)

    print("KERNEL_OK")
</pallas_src>

<mosaic_0001>
module attributes {stable_mosaic.version = 11 : i64} {
  func.func @kernel(%arg0: i32, %arg1: i32, %arg2: memref<64x128xf32, #tpu.memory_space<vmem>>, %arg3: memref<64x128xf32, #tpu.memory_space<vmem>>, %arg4: memref<1x3x8x128xf32, #tpu.memory_space<vmem>>) attributes {dimension_semantics = [#tpu.dimension_semantics<parallel>, #tpu.dimension_semantics<arbitrary>], iteration_bounds = array<i64: 1, 1>, scalar_prefetch = 0 : i64, scratch_operands = 0 : i64, tpu.core_type = #tpu.core_type<tc>, window_params = [{transform_indices = @transform_0, window_bounds = array<i64: 64, 128>}, {transform_indices = @transform_1, window_bounds = array<i64: 64, 128>}, {transform_indices = @transform_2, window_bounds = array<i64: 1, 3, 8, 128>}]} {
    %c0_i32 = arith.constant 0 : i32
    %0 = arith.cmpi eq, %arg1, %c0_i32 : i32
    %1 = arith.extui %0 : i1 to i32
    %c0_i32_0 = arith.constant 0 : i32
    %2 = arith.cmpi ne, %1, %c0_i32_0 : i32
    scf.if %2 {
      %cst_29 = arith.constant 0.000000e+00 : f32
      %43 = vector.broadcast %cst_29 : f32 to vector<1x3x8x128xf32>
      %c0_30 = arith.constant 0 : index
      %c0_31 = arith.constant 0 : index
      %c0_32 = arith.constant 0 : index
      %c0_33 = arith.constant 0 : index
      %44 = vector.load %arg4[%c0_30, %c0_31, %c0_32, %c0_33] : memref<1x3x8x128xf32, #tpu.memory_space<vmem>>, vector<1x3x8x128xf32>
      tpu.vector_store %arg4[%c0_30, %c0_31, %c0_32, %c0_33], %43 {strides = array<i32>} : memref<1x3x8x128xf32, #tpu.memory_space<vmem>>, vector<1x3x8x128xf32>,
    } else {
    }
    %cst = arith.constant 0.000000e+00 : f32
    %3 = vector.broadcast %cst : f32 to vector<8x128xf32>
    %c0_i32_1 = arith.constant 0 : i32
    %c64_i32 = arith.constant 64 : i32
    %4 = arith.muli %c0_i32_1, %c64_i32 : i32
    %5 = tpu.assume_multiple %4, 64 : i32
    %6 = arith.index_cast %5 : i32 to index
    %c0 = arith.constant 0 : index
    %7 = vector.load %arg2[%6, %c0] : memref<64x128xf32, #tpu.memory_space<vmem>>, vector<64x128xf32>
    %8 = arith.index_cast %5 : i32 to index
    %c0_2 = arith.constant 0 : index
    %9 = vector.load %arg3[%8, %c0_2] : memref<64x128xf32, #tpu.memory_space<vmem>>, vector<64x128xf32>
    %10 = arith.negf %7 : vector<64x128xf32>
    %11 = math.exp %10 : vector<64x128xf32>
    %cst_3 = arith.constant 1.000000e+00 : f32
    %12 = vector.broadcast %cst_3 : f32 to vector<64x128xf32>
    %13 = arith.addf %12, %11 : vector<64x128xf32>
    %14 = arith.divf %12, %13 : vector<64x128xf32>
    %15 = arith.mulf %14, %9 : vector<64x128xf32>
    %16 = vector.shape_cast %15 : vector<64x128xf32> to vector<8x8x128xf32>
    %cst_4 = arith.constant dense<0.000000e+00> : vector<8x128xf32>
    %17 = vector.multi_reduction <add>, %16, %cst_4 [0] : vector<8x8x128xf32> to vector<8x128xf32>
    %18 = arith.addf %3, %17 : vector<8x128xf32>
    %19 = vector.shape_cast %14 : vector<64x128xf32> to vector<8x8x128xf32>
    %cst_5 = arith.constant dense<0.000000e+00> : vector<8x128xf32>
    %20 = vector.multi_reduction <add>, %19, %cst_5 [0] : vector<8x8x128xf32> to vector<8x128xf32>
    %21 = arith.addf %3, %20 : vector<8x128xf32>
    %22 = vector.shape_cast %9 : vector<64x128xf32> to vector<8x8x128xf32>
    %cst_6 = arith.constant dense<0.000000e+00> : vector<8x128xf32>
    %23 = vector.multi_reduction <add>, %22, %cst_6 [0] : vector<8x8x128xf32> to vector<8x128xf32>
    %24 = arith.addf %3, %23 : vector<8x128xf32>
    %c1_i32 = arith.constant 1 : i32
    %c0_7 = arith.constant 0 : index
    %c0_8 = arith.constant 0 : index
    %c0_9 = arith.constant 0 : index
    %c0_10 = arith.constant 0 : index
    %25 = vector.load %arg4[%c0_7, %c0_8, %c0_9, %c0_10] : memref<1x3x8x128xf32, #tpu.memory_space<vmem>>, vector<1x1x8x128xf32>
    %26 = vector.shape_cast %25 : vector<1x1x8x128xf32> to vector<8x128xf32>
    %27 = arith.addf %26, %18 : vector<8x128xf32>
    %c0_11 = arith.constant 0 : index
    %c0_12 = arith.constant 0 : index
    %c0_13 = arith.constant 0 : index
    %c0_14 = arith.constant 0 : index
    %28 = vector.load %arg4[%c0_11, %c0_12, %c0_13, %c0_14] : memref<1x3x8x128xf32, #tpu.memory_space<vmem>>, vector<1x1x8x128xf32>
    %29 = vector.shape_cast %28 : vector<1x1x8x128xf32> to vector<8x128xf32>
    %30 = vector.shape_cast %27 : vector<8x128xf32> to vector<1x1x8x128xf32>
    tpu.vector_store %arg4[%c0_11, %c0_12, %c0_13, %c0_14], %30 {strides = array<i32>} : memref<1x3x8x128xf32, #tpu.memory_space<vmem>>, vector<1x1x8x128xf32>,
    %c0_15 = arith.constant 0 : index
    %c1 = arith.constant 1 : index
    %c0_16 = arith.constant 0 : index
    %c0_17 = arith.constant 0 : index
    %31 = vector.load %arg4[%c0_15, %c1, %c0_16, %c0_17] : memref<1x3x8x128xf32, #tpu.memory_space<vmem>>, vector<1x1x8x128xf32>
    %32 = vector.shape_cast %31 : vector<1x1x8x128xf32> to vector<8x128xf32>
    %33 = arith.addf %32, %21 : vector<8x128xf32>
    %c0_18 = arith.constant 0 : index
    %c1_19 = arith.constant 1 : index
    %c0_20 = arith.constant 0 : index
    %c0_21 = arith.constant 0 : index
    %34 = vector.load %arg4[%c0_18, %c1_19, %c0_20, %c0_21] : memref<1x3x8x128xf32, #tpu.memory_space<vmem>>, vector<1x1x8x128xf32>
    %35 = vector.shape_cast %34 : vector<1x1x8x128xf32> to vector<8x128xf32>
    %36 = vector.shape_cast %33 : vector<8x128xf32> to vector<1x1x8x128xf32>
    tpu.vector_store %arg4[%c0_18, %c1_19, %c0_20, %c0_21], %36 {strides = array<i32>} : memref<1x3x8x128xf32, #tpu.memory_space<vmem>>, vector<1x1x8x128xf32>,
    %c0_22 = arith.constant 0 : index
    %c2 = arith.constant 2 : index
    %c0_23 = arith.constant 0 : index
    %c0_24 = arith.constant 0 : index
    %37 = vector.load %arg4[%c0_22, %c2, %c0_23, %c0_24] : memref<1x3x8x128xf32, #tpu.memory_space<vmem>>, vector<1x1x8x128xf32>
    %38 = vector.shape_cast %37 : vector<1x1x8x128xf32> to vector<8x128xf32>
    %39 = arith.addf %38, %24 : vector<8x128xf32>
    %c0_25 = arith.constant 0 : index
    %c2_26 = arith.constant 2 : index
    %c0_27 = arith.constant 0 : index
    %c0_28 = arith.constant 0 : index
    %40 = vector.load %arg4[%c0_25, %c2_26, %c0_27, %c0_28] : memref<1x3x8x128xf32, #tpu.memory_space<vmem>>, vector<1x1x8x128xf32>
    %41 = vector.shape_cast %40 : vector<1x1x8x128xf32> to vector<8x128xf32>
    %42 = vector.shape_cast %39 : vector<8x128xf32> to vector<1x1x8x128xf32>
    tpu.vector_store %arg4[%c0_25, %c2_26, %c0_27, %c0_28], %42 {strides = array<i32>} : memref<1x3x8x128xf32, #tpu.memory_space<vmem>>, vector<1x1x8x128xf32>,
    return
  }
  func.func @transform_0(%arg0: i32, %arg1: i32) -> (i32, i32) {
    %c1_i32 = arith.constant 1 : i32
    %0 = arith.muli %arg0, %c1_i32 : i32
    %1 = arith.addi %0, %arg1 : i32
    %c0_i32 = arith.constant 0 : i32
    %2 = arith.minsi %1, %c0_i32 : i32
    %c0_i32_0 = arith.constant 0 : i32
    %c0_i32_1 = arith.constant 0 : i32
    return %2, %c0_i32_0 : i32, i32
  }
  func.func @transform_1(%arg0: i32, %arg1: i32) -> (i32, i32) {
    %c1_i32 = arith.constant 1 : i32
    %0 = arith.muli %arg0, %c1_i32 : i32
    %1 = arith.addi %0, %arg1 : i32
    %c0_i32 = arith.constant 0 : i32
    %2 = arith.minsi %1, %c0_i32 : i32
    %c0_i32_0 = arith.constant 0 : i32
    %c0_i32_1 = arith.constant 0 : i32
    return %2, %c0_i32_0 : i32, i32
  }
  func.func @transform_2(%arg0: i32, %arg1: i32) -> (i32, i32, i32, i32) {
    %c0_i32 = arith.constant 0 : i32
    %c0_i32_0 = arith.constant 0 : i32
    %c0_i32_1 = arith.constant 0 : i32
    %c0_i32_2 = arith.constant 0 : i32
    return %arg0, %c0_i32, %c0_i32_0, %c0_i32_1 : i32, i32, i32, i32
  }
}

</mosaic_0001>

<llo_original>
// kernel: tpu_custom_call.1
$region0: #{tpu_custom_call.1}
  #allocation0 [shape = 'u32[]', space=smem, size = 0x4, offset = 0x4, fixed_abs, tag = 'smem constant byte address 0x4 - core index']
  #allocation1 [shape = 'u32[72,128]{1,0:T(1,128)}', space=vmem, size = 0x9000, scoped, tag = 'internal scratch']
  %s0 = inlined_call_operand.hbm [shape: f32[64,128], index: 0, kind: input, shape index: {}]
  %s1 = inlined_call_operand.hbm [shape: f32[64,128], index: 1, kind: input, shape index: {}]
  %s2 = inlined_call_operand.hbm [shape: f32[1,3,8,128], index: 2, kind: output, shape index: {}]
  %s3 = sld [smem:[#allocation0]]
  $region30: #{tpu_custom_call.1} parent=0
    _
  %s5 = ssub.s32 1, %s3
  %s6 = scalar_select 0, %s5, %s3
  $region1: #{tpu_custom_call.1} parent=0
    #allocation2 [shape = 'u8[32768]{0}', space=vmem, size = 0x8000, scoped, tag = 'input window, operand 0, single buffered']
    #allocation3 [shape = 's32[1]{0}', space=sflag, size = 0x4, scoped, tag = 'scoped memory for tpu_custom_call.1']
    #allocation4 [shape = 's32[1]{0}', space=sflag, size = 0x4, scoped, tag = 'scoped memory for tpu_custom_call.1']
    #allocation5 [shape = 'u8[32768]{0}', space=vmem, size = 0x8000, scoped, tag = 'input window, operand 1, single buffered']
    #allocation6 [shape = 's32[1]{0}', space=sflag, size = 0x4, scoped, tag = 'scoped memory for tpu_custom_call.1']
    #allocation7 [shape = 'u8[12288]{0}', space=vmem, size = 0x3000, scoped, tag = 'output window, operand 0, single buffered']
    %7 = vsyncpa [#allocation3], 0
    %8 = vsyncpa [#allocation6], 0
    %9 = vsyncpa [#allocation4], 0
    // Predicated region
    $region2: #{tpu_custom_call.1} parent=1 // pred_check
      _
    $region3: #{tpu_custom_call.1} parent=1 // pred_check_branch
      %11 = sbr.rel (0) target = $region5
    $region4: #{tpu_custom_call.1} parent=1 // pred_region
      %s12 = sadd.s32 0, 0
      %p13 = scmp.lt.s32.totalorder %s12, 0
      %s14 = scalar_select %p13, %s12, 0
      %s15 = smul.u32 8, %s14
      %17 = vsyncadd [#allocation3], 0
      %s18 = smul.addr %s15, 8
      %s19 = scalar_lea.hbm %s0, %s18
      %s20 = sshll.u32 %s19, 4
      %s21 = int_to_ptr.hbm [resolvable:$true] %s20
      %s22 = sshll.u32 [#allocation2], 4
      %s23 = int_to_ptr.vmem [resolvable:$true] %s22
      %28 = dma.hbm_to_vmem [thread:$0]  %s21, 1024, %s23, [#allocation3], 128, 128, 8
    $region5: #{tpu_custom_call.1} parent=1 // pred_fallthru
      _
    // Predicated region
    $region6: #{tpu_custom_call.1} parent=1 // pred_check
      _
    $region7: #{tpu_custom_call.1} parent=1 // pred_check_branch
      %30 = sbr.rel (0) target = $region9
    $region8: #{tpu_custom_call.1} parent=1 // pred_region
      %s31 = sadd.s32 0, 0
      %p32 = scmp.lt.s32.totalorder %s31, 0
      %s33 = scalar_select %p32, %s31, 0
      %s34 = smul.u32 8, %s33
      %36 = vsyncadd [#allocation6], 0
      %s37 = smul.addr %s34, 8
      %s38 = scalar_lea.hbm %s1, %s37
      %s39 = sshll.u32 %s38, 4
      %s40 = int_to_ptr.hbm [resolvable:$true] %s39
      %s41 = sshll.u32 [#allocation5], 4
      %s42 = int_to_ptr.vmem [resolvable:$true] %s41
      %47 = dma.hbm_to_vmem [thread:$0]  %s40, 1024, %s42, [#allocation6], 128, 128, 8
    $region9: #{tpu_custom_call.1} parent=1 // pred_fallthru
      _
    // Predicated region
    $region10: #{tpu_custom_call.1} parent=1 // pred_check
      _
    $region11: #{tpu_custom_call.1} parent=1 // pred_check_branch
      %49 = sbr.rel (0) target = $region13
    $region12: #{tpu_custom_call.1} parent=1 // pred_region
      %51 = dma.done [#allocation3], 1024
    $region13: #{tpu_custom_call.1} parent=1 // pred_fallthru
      _
    // Predicated region
    $region14: #{tpu_custom_call.1} parent=1 // pred_check
      _
    $region15: #{tpu_custom_call.1} parent=1 // pred_check_branch
      %53 = sbr.rel (0) target = $region17
    $region16: #{tpu_custom_call.1} parent=1 // pred_region
      %55 = dma.done [#allocation6], 1024
    $region17: #{tpu_custom_call.1} parent=1 // pred_fallthru
      _
    %s56 = sadd.s32 0, 0
    %p57 = scmp.lt.s32.totalorder %s56, 0
    %s58 = scalar_select %p57, %s56, 0
    %s59 = smul.u32 8, %s58
    %s60 = sadd.s32 0, 0
    %p61 = scmp.lt.s32.totalorder %s60, 0
    %s62 = scalar_select %p61, %s60, 0
    %s63 = smul.u32 8, %s62
    %p64 = scmp.eq.s32.totalorder 0, 0
    // Predicated region
    $region18: #{tpu_custom_call.1} parent=1 // pred_check
      %p65 = pneg %p64
    $region19: #{tpu_custom_call.1} parent=1 // pred_check_branch
      %67 = sbr.rel (%p65) target = $region21
    $region20: #{tpu_custom_call.1} parent=1 // pred_region
      %68 = vst [vmem:[#allocation7] sm:$0xff] 0.0
      %69 = vst [vmem:[#allocation7 + $0x8] sm:$0xff] 0.0
      %70 = vst [vmem:[#allocation7 + $0x10] sm:$0xff] 0.0
    $region21: #{tpu_custom_call.1} parent=1 // pred_fallthru
      _
    %v71 = vld [vmem:[#allocation2] sm:$0xff]
    %v72 = vld [vmem:[#allocation2 + $0x8] sm:$0xff]
    %v73 = vld [vmem:[#allocation2 + $0x10] sm:$0xff]
    %v74 = vld [vmem:[#allocation2 + $0x18] sm:$0xff]
    %v75 = vld [vmem:[#allocation2 + $0x20] sm:$0xff]
    %v76 = vld [vmem:[#allocation2 + $0x28] sm:$0xff]
    %v77 = vld [vmem:[#allocation2 + $0x30] sm:$0xff]
    %v78 = vld [vmem:[#allocation2 + $0x38] sm:$0xff]
    %v79 = vld [vmem:[#allocation5] sm:$0xff]
    %v80 = vld [vmem:[#allocation5 + $0x8] sm:$0xff]
    %v81 = vld [vmem:[#allocation5 + $0x10] sm:$0xff]
    %v82 = vld [vmem:[#allocation5 + $0x18] sm:$0xff]
    %v83 = vld [vmem:[#allocation5 + $0x20] sm:$0xff]
    %v84 = vld [vmem:[#allocation5 + $0x28] sm:$0xff]
    %v85 = vld [vmem:[#allocation5 + $0x30] sm:$0xff]
    %v86 = vld [vmem:[#allocation5 + $0x38] sm:$0xff]
    %v87 = vxor.u32 %v71, 2147483648
    %v88 = vxor.u32 %v72, 2147483648
    %v89 = vxor.u32 %v73, 2147483648
    %v90 = vxor.u32 %v74, 2147483648
    %v91 = vxor.u32 %v75, 2147483648
    %v92 = vxor.u32 %v76, 2147483648
    %v93 = vxor.u32 %v77, 2147483648
    %v94 = vxor.u32 %v78, 2147483648
    %v95 = vmul.f32 %v87, 1.442695
    %v96 = vpow.pop %v95
    %v97 = vmul.f32 %v88, 1.442695
    %v98 = vpow.pop %v97
    %v99 = vmul.f32 %v89, 1.442695
    %v100 = vpow.pop %v99
    %v101 = vmul.f32 %v90, 1.442695
    %v102 = vpow.pop %v101
    %v103 = vmul.f32 %v91, 1.442695
    %v104 = vpow.pop %v103
    %v105 = vmul.f32 %v92, 1.442695
    %v106 = vpow.pop %v105
    %v107 = vmul.f32 %v93, 1.442695
    %v108 = vpow.pop %v107
    %v109 = vmul.f32 %v94, 1.442695
    %v110 = vpow.pop %v109
    %v111 = vadd.f32 %v96, 1.0
    %v112 = vadd.f32 %v98, 1.0
    %v113 = vadd.f32 %v100, 1.0
    %v114 = vadd.f32 %v102, 1.0
    %v115 = vadd.f32 %v104, 1.0
    %v116 = vadd.f32 %v106, 1.0
    %v117 = vadd.f32 %v108, 1.0
    %v118 = vadd.f32 %v110, 1.0
    %v119 = vrcp.pop %v111
    %v120 = vmul.f32 %v111, %v119
    %v121 = vsub.f32 1.0, %v120
    %v122 = vmul.f32 %v119, %v121
    %v123 = vadd.f32 %v119, %v122
    %vm124 = vweird.f32 %v111
    %vm125 = vweird.f32 %v119
    %vm126 = vmor %vm124, %vm125
    %v127 = vsel %vm126, %v119, %v123
    %v128 = vand.u32 2147483647, %v111
    %vm129 = vcmp.eq.f32.partialorder %v128, 8.507059e+37
    %v130 = vand.u32 %v111, 2147483648
    %v131 = vor.u32 1.1754944e-38, %v130
    %v132 = vsel %vm129, %v131, %v127
    %v133 = vmul.f32 1.0, %v132
    %v134 = vrcp.pop %v112
    %v135 = vmul.f32 %v112, %v134
    %v136 = vsub.f32 1.0, %v135
    %v137 = vmul.f32 %v134, %v136
    %v138 = vadd.f32 %v134, %v137
    %vm139 = vweird.f32 %v112
    %vm140 = vweird.f32 %v134
    %vm141 = vmor %vm139, %vm140
    %v142 = vsel %vm141, %v134, %v138
    %v143 = vand.u32 2147483647, %v112
    %vm144 = vcmp.eq.f32.partialorder %v143, 8.507059e+37
    %v145 = vand.u32 %v112, 2147483648
    %v146 = vor.u32 1.1754944e-38, %v145
    %v147 = vsel %vm144, %v146, %v142
    %v148 = vmul.f32 1.0, %v147
    %v149 = vrcp.pop %v113
    %v150 = vmul.f32 %v113, %v149
    %v151 = vsub.f32 1.0, %v150
    %v152 = vmul.f32 %v149, %v151
    %v153 = vadd.f32 %v149, %v152
    %vm154 = vweird.f32 %v113
    %vm155 = vweird.f32 %v149
    %vm156 = vmor %vm154, %vm155
    %v157 = vsel %vm156, %v149, %v153
    %v158 = vand.u32 2147483647, %v113
    %vm159 = vcmp.eq.f32.partialorder %v158, 8.507059e+37
    %v160 = vand.u32 %v113, 2147483648
    %v161 = vor.u32 1.1754944e-38, %v160
    %v162 = vsel %vm159, %v161, %v157
    %v163 = vmul.f32 1.0, %v162
    %v164 = vrcp.pop %v114
    %v165 = vmul.f32 %v114, %v164
    %v166 = vsub.f32 1.0, %v165
    %v167 = vmul.f32 %v164, %v166
    %v168 = vadd.f32 %v164, %v167
    %vm169 = vweird.f32 %v114
    %vm170 = vweird.f32 %v164
    %vm171 = vmor %vm169, %vm170
    %v172 = vsel %vm171, %v164, %v168
    %v173 = vand.u32 2147483647, %v114
    %vm174 = vcmp.eq.f32.partialorder %v173, 8.507059e+37
    %v175 = vand.u32 %v114, 2147483648
    %v176 = vor.u32 1.1754944e-38, %v175
    %v177 = vsel %vm174, %v176, %v172
    %v178 = vmul.f32 1.0, %v177
    %v179 = vrcp.pop %v115
    %v180 = vmul.f32 %v115, %v179
    %v181 = vsub.f32 1.0, %v180
    %v182 = vmul.f32 %v179, %v181
    %v183 = vadd.f32 %v179, %v182
    %vm184 = vweird.f32 %v115
    %vm185 = vweird.f32 %v179
    %vm186 = vmor %vm184, %vm185
    %v187 = vsel %vm186, %v179, %v183
    %v188 = vand.u32 2147483647, %v115
    %vm189 = vcmp.eq.f32.partialorder %v188, 8.507059e+37
    %v190 = vand.u32 %v115, 2147483648
    %v191 = vor.u32 1.1754944e-38, %v190
    %v192 = vsel %vm189, %v191, %v187
    %v193 = vmul.f32 1.0, %v192
    %v194 = vrcp.pop %v116
    %v195 = vmul.f32 %v116, %v194
    %v196 = vsub.f32 1.0, %v195
    %v197 = vmul.f32 %v194, %v196
    %v198 = vadd.f32 %v194, %v197
    %vm199 = vweird.f32 %v116
    %vm200 = vweird.f32 %v194
    %vm201 = vmor %vm199, %vm200
    %v202 = vsel %vm201, %v194, %v198
    %v203 = vand.u32 2147483647, %v116
    %vm204 = vcmp.eq.f32.partialorder %v203, 8.507059e+37
    %v205 = vand.u32 %v116, 2147483648
    %v206 = vor.u32 1.1754944e-38, %v205
    %v207 = vsel %vm204, %v206, %v202
    %v208 = vmul.f32 1.0, %v207
    %v209 = vrcp.pop %v117
    %v210 = vmul.f32 %v117, %v209
    %v211 = vsub.f32 1.0, %v210
    %v212 = vmul.f32 %v209, %v211
    %v213 = vadd.f32 %v209, %v212
    %vm214 = vweird.f32 %v117
    %vm215 = vweird.f32 %v209
    %vm216 = vmor %vm214, %vm215
    %v217 = vsel %vm216, %v209, %v213
    %v218 = vand.u32 2147483647, %v117
    %vm219 = vcmp.eq.f32.partialorder %v218, 8.507059e+37
    %v220 = vand.u32 %v117, 2147483648
    %v221 = vor.u32 1.1754944e-38, %v220
    %v222 = vsel %vm219, %v221, %v217
    %v223 = vmul.f32 1.0, %v222
    %v224 = vrcp.pop %v118
    %v225 = vmul.f32 %v118, %v224
    %v226 = vsub.f32 1.0, %v225
    %v227 = vmul.f32 %v224, %v226
    %v228 = vadd.f32 %v224, %v227
    %vm229 = vweird.f32 %v118
    %vm230 = vweird.f32 %v224
    %vm231 = vmor %vm229, %vm230
    %v232 = vsel %vm231, %v224, %v228
    %v233 = vand.u32 2147483647, %v118
    %vm234 = vcmp.eq.f32.partialorder %v233, 8.507059e+37
    %v235 = vand.u32 %v118, 2147483648
    %v236 = vor.u32 1.1754944e-38, %v235
    %v237 = vsel %vm234, %v236, %v232
    %v238 = vmul.f32 1.0, %v237
    %v239 = vmul.f32 %v133, %v79
    %v240 = vmul.f32 %v148, %v80
    %v241 = vmul.f32 %v163, %v81
    %v242 = vmul.f32 %v178, %v82
    %v243 = vmul.f32 %v193, %v83
    %v244 = vmul.f32 %v208, %v84
    %v245 = vmul.f32 %v223, %v85
    %v246 = vmul.f32 %v238, %v86
    %v247 = vadd.f32 %v239, %v240
    %v248 = vadd.f32 %v247, %v241
    %v249 = vadd.f32 %v248, %v242
    %v250 = vadd.f32 %v249, %v243
    %v251 = vadd.f32 %v250, %v244
    %v252 = vadd.f32 %v251, %v245
    %v253 = vadd.f32 %v252, %v246
    %v254 = vadd.f32 %v253, 0.0
    %v255 = vadd.f32 %v133, %v148
    %v256 = vadd.f32 %v255, %v163
    %v257 = vadd.f32 %v256, %v178
    %v258 = vadd.f32 %v257, %v193
    %v259 = vadd.f32 %v258, %v208
    %v260 = vadd.f32 %v259, %v223
    %v261 = vadd.f32 %v260, %v238
    %v262 = vadd.f32 %v261, 0.0
    %v263 = vadd.f32 %v79, %v80
    %v264 = vadd.f32 %v263, %v81
    %v265 = vadd.f32 %v264, %v82
    %v266 = vadd.f32 %v265, %v83
    %v267 = vadd.f32 %v266, %v84
    %v268 = vadd.f32 %v267, %v85
    %v269 = vadd.f32 %v268, %v86
    %v270 = vadd.f32 %v269, 0.0
    %v271 = vld [vmem:[#allocation7] sm:$0xff]
    %v272 = vadd.f32 %v271, %v254
    %273 = vst [vmem:[#allocation7] sm:$0xff] %v272
    %s274 = scalar_lea.vmem [#allocation7], 8
    %v275 = vld [vmem:[%s274] sm:$0xff]
    %v276 = vadd.f32 %v275, %v262
    %277 = vst [vmem:[%s274] sm:$0xff] %v276
    %s278 = scalar_lea.vmem [#allocation7], 16
    %v279 = vld [vmem:[%s278] sm:$0xff]
    %v280 = vadd.f32 %v279, %v270
    %281 = vst [vmem:[%s278] sm:$0xff] %v280
    // Predicated region
    $region22: #{tpu_custom_call.1} parent=1 // pred_check
      _
    $region23: #{tpu_custom_call.1} parent=1 // pred_check_branch
      %283 = sbr.rel (0) target = $region25
    $region24: #{tpu_custom_call.1} parent=1 // pred_region
      %285 = vsyncadd [#allocation4], 0
      %s286 = sshll.u32 [#allocation7], 4
      %s287 = int_to_ptr.vmem [resolvable:$true] %s286
      %s288 = sshll.u32 %s2, 4
      %s289 = int_to_ptr.hbm [resolvable:$true] %s288
      %294 = dma.vmem_to_hbm [thread:$0]  %s287, 384, %s289, [#allocation4], 128, 128, 8
    $region25: #{tpu_custom_call.1} parent=1 // pred_fallthru
      _
    // Predicated region
    $region26: #{tpu_custom_call.1} parent=1 // pred_check
      _
    $region27: #{tpu_custom_call.1} parent=1 // pred_check_branch
      %296 = sbr.rel (0) target = $region29
    $region28: #{tpu_custom_call.1} parent=1 // pred_region
      %298 = dma.done [#allocation4], 384
    $region29: #{tpu_custom_call.1} parent=1 // pred_fallthru
      _
    %299 = vsyncpa [#allocation3], 1
    %300 = vsyncpa [#allocation6], 1
    %301 = vsyncpa [#allocation4], 1

</llo_original>
